<compile_context>
chip_gen: v5e
topology: v5e:2x2
jax: 0.10.0
libtpu: 0.0.40
codegen_flags: <defaults>
</compile_context>

<pallas_src>
import jax
import jax.numpy as jnp
from jax.experimental import pallas as pl
from jax.experimental.pallas import tpu as pltpu


def _dma_identity_kernel(x_hbm, o_hbm, sem):
    # Whole-array HBM->HBM DMA: contiguous source and destination of
    # identical shape, one descriptor, bandwidth-bound on the DMA engine.
    cp = pltpu.make_async_copy(x_hbm, o_hbm, sem)
    cp.start()
    cp.wait()


def _pallas_identity_copy(x: jax.Array) -> jax.Array:
    """Identity copy via a single HBM->HBM DMA (no VMEM staging, no grid)."""
    return pl.pallas_call(
        _dma_identity_kernel,
        out_shape=jax.ShapeDtypeStruct(x.shape, x.dtype),
        in_specs=[pl.BlockSpec(memory_space=pl.ANY)],
        out_specs=pl.BlockSpec(memory_space=pl.ANY),
        scratch_shapes=[pltpu.SemaphoreType.DMA],
    )(x)


def unsqueeze(x: jax.Array, dim: int, *, use_kernel: bool = True) -> jax.Array:
    """Pallas-backed equivalent of torch.Tensor.unsqueeze(dim).

    With use_kernel=False (the recommended production path) this is a pure
    metadata reshape and touches HBM zero times.
    """
    ndim_out = x.ndim + 1
    # torch.unsqueeze accepts dim in [-(ndim+1), ndim]
    if not (-ndim_out <= dim <= x.ndim):
        raise ValueError(f"dim {dim} out of range for output rank {ndim_out}")
    if dim < 0:
        dim += ndim_out
    out_shape = x.shape[:dim] + (1,) + x.shape[dim:]

    if (not use_kernel) or x.size == 0:
        # Pure metadata op — the actual optimum for unsqueeze.
        return jnp.reshape(x, out_shape)

    # Kernel path (exercise requires a Pallas kernel): one HBM->HBM DMA of
    # the contiguous buffer, then a metadata-only reshape to the target rank.
    copied = _pallas_identity_copy(x)
    return jnp.reshape(copied, out_shape)


if __name__ == "__main__":
    key = jax.random.PRNGKey(0)
    # Small NCHW input consistent with a convnext-style feature map.
    x = jax.random.normal(key, (2, 4, 16, 16), dtype=jnp.float32)

    dim = 1  # the module is constructed with a fixed dim; use 1 here
    out = unsqueeze(x, dim)
    jax.block_until_ready(out)

    ref = jnp.expand_dims(x, axis=dim)
    assert out.shape == (2, 1, 4, 16, 16), out.shape
    assert out.dtype == x.dtype
    assert bool(jnp.array_equal(out, ref))

    # Negative dim, like torch.unsqueeze(-1).
    out_neg = unsqueeze(x, -1)
    jax.block_until_ready(out_neg)
    assert out_neg.shape == (2, 4, 16, 16, 1), out_neg.shape
    assert bool(jnp.array_equal(out_neg, jnp.expand_dims(x, axis=-1)))

    # Oddly-sized, non-128-divisible bf16 tensor — previously the fragile
    # fallback path; the DMA copy handles it with no alignment constraints.
    x_odd = jax.random.normal(key, (3, 5, 7), dtype=jnp.bfloat16)
    out_odd = unsqueeze(x_odd, 0)
    jax.block_until_ready(out_odd)
    assert out_odd.shape == (1, 3, 5, 7), out_odd.shape
    assert bool(jnp.array_equal(out_odd, jnp.expand_dims(x_odd, axis=0)))

    # Zero-copy metadata path (the recommended production path).
    out_meta = unsqueeze(x, 2, use_kernel=False)
    jax.block_until_ready(out_meta)
    assert out_meta.shape == (2, 4, 1, 16, 16), out_meta.shape
    assert bool(jnp.array_equal(out_meta, jnp.expand_dims(x, axis=2)))

    print("KERNEL_OK")
</pallas_src>

<mosaic_0001>
module attributes {stable_mosaic.version = 11 : i64} {
  func.func @_dma_identity_kernel(%arg0: memref<2x4x16x16xf32, #tpu.memory_space<any>>, %arg1: memref<2x4x16x16xf32, #tpu.memory_space<any>>, %arg2: memref<!tpu.dma_semaphore, #tpu.memory_space<semaphore_mem>>) attributes {dimension_semantics = [], scalar_prefetch = 0 : i64, scratch_operands = 1 : i64, tpu.core_type = #tpu.core_type<tc>} {
    tpu.enqueue_dma source(%arg0 : memref<2x4x16x16xf32, #tpu.memory_space<any>>) target(%arg1 : memref<2x4x16x16xf32, #tpu.memory_space<any>>) target_semaphore(%arg2 : memref<!tpu.dma_semaphore, #tpu.memory_space<semaphore_mem>>)
    tpu.wait_dma2 semaphore(%arg2 : memref<!tpu.dma_semaphore, #tpu.memory_space<semaphore_mem>>) src(%arg0 : memref<2x4x16x16xf32, #tpu.memory_space<any>>) dst(%arg1 : memref<2x4x16x16xf32, #tpu.memory_space<any>>)
    return
  }
}

</mosaic_0001>

<llo_original>
// kernel: tpu_custom_call.1
$region0: #{tpu_custom_call.1}
  #allocation0 [shape = 'u32[]', space=smem, size = 0x4, offset = 0x4, fixed_abs, tag = 'smem constant byte address 0x4 - core index']
  #allocation1 [shape = 'u32[72,128]{1,0:T(1,128)}', space=vmem, size = 0x9000, scoped, tag = 'internal scratch']
  #allocation2 [shape = 's32[1]{0}', space=sflag, size = 0x4, scoped, tag = 'scratch operand']
  #allocation3 [shape = 's32[]', space=sflag, size = 0x4, offset = 0, fixed_abs, tag = 'sflag constant byte address 0x0 - dummy sync flag']
  #allocation4 [shape = 'u32[0]{0}', space=smem, size = 0, offset = 0, fixed_abs, tag = 'smem constant byte address 0x0 - null']
  %s0 = inlined_call_operand.hbm [shape: f32[2,4,16,16], index: 0, kind: input, shape index: {}]
  %s1 = inlined_call_operand.hbm [shape: f32[2,4,16,16], index: 1, kind: output, shape index: {}]
  %s2 = sld [smem:[#allocation0]]
  $region2: #{tpu_custom_call.1} parent=0
    _
  %s4 = ssub.s32 1, %s2
  %s5 = scalar_select 0, %s4, %s2
  %s7 = sshll.u32 1, 14
  %s8 = sxor.u32 4294967295, %s7
  %s10 = sshll.u32 %s0, 4
  %s11 = int_to_ptr.hbm [resolvable:$true] %s10
  %s12 = sshll.u32 %s1, 4
  %s13 = int_to_ptr.hbm [resolvable:$true] %s12
  %16 = dma.general %s11, 2048, %s13, [#allocation2], [#allocation3], [#allocation4], 0, 0
  %s17 = smul.u32 2, 4
  %s18 = smul.u32 %s17, 16
  %s19 = smul.u32 %s18, 1
  %s20 = sshll.u32 %s19, 4
  %21 = dma.done [#allocation2], %s20
  %22 = vsyncmov [#allocation2]
  %s23 = vpop.sfrf %22
  %p24 = scmp.eq.s32.totalorder %s23, 0
  %p25 = pneg %p24
  %27 = shalt.err (%p25)

</llo_original>
